<compile_context>
chip_gen: v7x
topology: tpu7x:2x2x1
jax: 0.10.0
libtpu: 0.0.40
codegen_flags: <defaults>
</compile_context>

<pallas_src>
import functools

import jax
import jax.numpy as jnp
from jax import lax
from jax.experimental import pallas as pl
from jax.experimental.pallas import tpu as pltpu


_NEG_INF = -1e30  # finite "masked" value; exp() underflows to 0 exactly like -finfo.max


# ---------------------------------------------------------------------------
# config helpers (mirror the PyTorch module)
# ---------------------------------------------------------------------------

def calc_same_padding(kernel_size, dilation=1):
    return dilation * (kernel_size - 1) // 2


def cast_tuple(val, size=1):
    return val if isinstance(val, tuple) else (val,) * size


def mult_reduce(arr):
    return functools.reduce(lambda x, y: x * y, arr, 1)


def padding_to_multiple_of(n, mult):
    r = n % mult
    return 0 if r == 0 else mult - r


def _round_up(a, m):
    return (a + m - 1) // m * m


# ---------------------------------------------------------------------------
# reference-only helpers (used by the pure-JAX reference below)
# ---------------------------------------------------------------------------

def _unfold3d(t, kernel_size, dilation):
    """t: (b, h, Fp, Hp, Wp, d) zero-padded volume -> (b, h, N, kernel_numel, d)."""
    kf, kh, kw = kernel_size
    df, dh, dw = dilation
    b, h, Fp, Hp, Wp, d = t.shape
    Fo = Fp - df * (kf - 1)
    Ho = Hp - dh * (kh - 1)
    Wo = Wp - dw * (kw - 1)
    slices = []
    for jf in range(kf):
        for jh in range(kh):
            for jw in range(kw):
                sl = t[:, :, jf * df:jf * df + Fo,
                       jh * dh:jh * dh + Ho,
                       jw * dw:jw * dw + Wo, :]
                slices.append(sl.reshape(b, h, Fo * Ho * Wo, d))
    return jnp.stack(slices, axis=3)


def _build_neighborhood_mask(video_shape, kernel_size, dilation, vid_pad):
    """Boolean (max_tokens, kernel_numel + 1) mask; True => attend-position is padding."""
    max_frames, fmap, _ = video_shape
    ones = jnp.ones((1, 1, max_frames, fmap, fmap, 1), jnp.float32)
    ones = jnp.pad(ones, ((0, 0), (0, 0), vid_pad[0], vid_pad[1], vid_pad[2], (0, 0)))
    unf = _unfold3d(ones, kernel_size, dilation)[0, 0, :, :, 0]
    pad_mask = unf == 0.0
    bos_col = jnp.zeros((pad_mask.shape[0], 1), dtype=bool)
    return jnp.concatenate([bos_col, pad_mask], axis=1)


# ---------------------------------------------------------------------------
# tiled linear projection kernel
# ---------------------------------------------------------------------------

def _linear_kernel(x_ref, w_ref, b_ref, o_ref):
    acc = jnp.dot(x_ref[...], w_ref[...], preferred_element_type=jnp.float32)
    o_ref[...] = (acc + b_ref[...].astype(jnp.float32)).astype(o_ref.dtype)


def pallas_linear(x, w, b=None, *, row_tile=256):
    """y = x @ w (+ b), tiled over rows so the pipeline overlaps HBM and the MXU
    and so both v7x TensorCores get work ('parallel' grid axis)."""
    M, K = x.shape
    _, N = w.shape
    if b is None:
        b = jnp.zeros((N,), x.dtype)
    b2 = b.reshape(1, N).astype(x.dtype)

    tm = min(row_tile, _round_up(M, 8))
    Mp = _round_up(M, tm)
    xp = jnp.pad(x, ((0, Mp - M), (0, 0))) if Mp != M else x

    out = pl.pallas_call(
        _linear_kernel,
        out_shape=jax.ShapeDtypeStruct((Mp, N), x.dtype),
        grid_spec=pltpu.PrefetchScalarGridSpec(
            num_scalar_prefetch=0,
            grid=(Mp // tm,),
            in_specs=[pl.BlockSpec((tm, K), lambda i: (i, 0)),
                      pl.BlockSpec((K, N), lambda i: (0, 0)),
                      pl.BlockSpec((1, N), lambda i: (0, 0))],
            out_specs=pl.BlockSpec((tm, N), lambda i: (i, 0)),
        ),
        compiler_params=pltpu.CompilerParams(
            dimension_semantics=("parallel",),
            vmem_limit_bytes=40 * 1024 * 1024,
        ),
    )(xp, w, b2)
    return out[:M] if Mp != M else out


# ---------------------------------------------------------------------------
# 3DNA attention kernel (in-kernel neighbourhood gather from a compact halo)
# ---------------------------------------------------------------------------

def _make_attn_kernel(*, H, D, fc, fmap, kernel_size, dilation, pad_front,
                      max_frames, F_ext):
    kf, kh, kw = kernel_size
    df, dh, dw = dilation
    pf_f, pf_h, pf_w = pad_front
    offsets = [(jf, jh, jw) for jf in range(kf) for jh in range(kh) for jw in range(kw)]
    J1 = len(offsets) + 1          # + BOS column at j = 0
    Fh = fc + df * (kf - 1)        # frames per K/V halo

    def kernel(q_ref, kvol_ref, vvol_ref, kbos_ref, vbos_ref, th_ref, o_ref,
               khalo, vhalo, a_scr, bias_scr, sem):
        # q_ref:   (fc, fmap, fmap, H*D)   pre-scaled queries (auto-pipelined block)
        # kvol/vvol: (B*F_ext, Hp, Wp, H*D) compact padded K/V volumes in HBM (ANY)
        # kbos/vbos: (1, 1, H*D)           BOS key / value of this batch
        # th_ref:  (H, H) SMEM             talking-heads 1x1-conv weights
        # o_ref:   (fc, fmap, fmap, H*D)   lane-dense output block
        bi = pl.program_id(0)
        ci = pl.program_id(1)
        f0 = ci * fc               # first query frame of this tile

        # Kick off the compact halo DMAs.  V is waited on only after stage A so its
        # transfer overlaps the q.k / softmax compute.
        k_cp = pltpu.make_async_copy(
            kvol_ref.at[pl.ds(bi * F_ext + f0, Fh)], khalo, sem.at[0])
        v_cp = pltpu.make_async_copy(
            vvol_ref.at[pl.ds(bi * F_ext + f0, Fh)], vhalo, sem.at[1])
        k_cp.start()
        v_cp.start()

        # Padding-mask bias per kernel offset, computed from coordinates in-kernel
        # (shared by all heads; built from the *max_frames* volume exactly like the
        #  module's registered buffer).
        fco = f0 + lax.broadcasted_iota(jnp.int32, (fc, fmap, fmap), 0)
        yco = lax.broadcasted_iota(jnp.int32, (fc, fmap, fmap), 1)
        xco = lax.broadcasted_iota(jnp.int32, (fc, fmap, fmap), 2)
        bias_scr[0] = jnp.zeros((fc, fmap, fmap), jnp.float32)     # BOS never masked
        for j, (jf, jh, jw) in enumerate(offsets):
            oob = ((fco + jf * df < pf_f) | (fco + jf * df >= pf_f + max_frames) |
                   (yco + jh * dh < pf_h) | (yco + jh * dh >= pf_h + fmap) |
                   (xco + jw * dw < pf_w) | (xco + jw * dw >= pf_w + fmap))
            bias_scr[j + 1] = jnp.where(oob, jnp.float32(_NEG_INF), jnp.float32(0.0))

        # talking-heads scalars (SMEM reads hoisted out of the loops)
        th = [[th_ref[o, h] for h in range(H)] for o in range(H)]

        k_cp.wait()

        # ---- stage A: sims + stable softmax, per head, staged through VMEM scratch
        #      (bounds register pressure instead of keeping H x J tiles live). ----
        for h in range(H):
            qh = q_ref[:, :, :, h * D:(h + 1) * D].astype(jnp.float32)   # (fc,fmap,fmap,D)
            kb = kbos_ref[0, :, h * D:(h + 1) * D].astype(jnp.float32)   # (1,D)
            s = jnp.sum(qh * kb, axis=-1)                                # (fc,fmap,fmap)
            a_scr[h, 0] = s
            m = s
            for j, (jf, jh, jw) in enumerate(offsets):
                ks = khalo[jf * df:jf * df + fc,
                           jh * dh:jh * dh + fmap,
                           jw * dw:jw * dw + fmap,
                           h * D:(h + 1) * D].astype(jnp.float32)        # gather = VMEM slice
                s = jnp.sum(qh * ks, axis=-1) + bias_scr[j + 1]
                a_scr[h, j + 1] = s
                m = jnp.maximum(m, s)
            # stable softmax: softmax(x - max(x)) == stable_softmax of the reference
            l = jnp.zeros((fc, fmap, fmap), jnp.float32)
            for j in range(J1):
                p = jnp.exp(a_scr[h, j] - m)
                a_scr[h, j] = p
                l = l + p
            inv_l = pl.reciprocal(l, approx=True)                        # EUP, not VPU divide
            for j in range(J1):
                a_scr[h, j] = a_scr[h, j] * inv_l

        v_cp.wait()

        # ---- stage B: talking-heads mix + weighted sum of V, written per output
        #      head into the lane-dense (fc, fmap, fmap, H*D) output block. ----
        for o in range(H):
            vb = vbos_ref[0, :, o * D:(o + 1) * D].astype(jnp.float32)   # (1,D)
            mix = a_scr[0, 0] * th[o][0]
            for h in range(1, H):
                mix = mix + a_scr[h, 0] * th[o][h]
            acc = mix[..., None] * vb                                    # (fc,fmap,fmap,D)
            for j, (jf, jh, jw) in enumerate(offsets):
                mix = a_scr[0, j + 1] * th[o][0]
                for h in range(1, H):
                    mix = mix + a_scr[h, j + 1] * th[o][h]
                vs = vhalo[jf * df:jf * df + fc,
                           jh * dh:jh * dh + fmap,
                           jw * dw:jw * dw + fmap,
                           o * D:(o + 1) * D].astype(jnp.float32)
                acc = acc + mix[..., None] * vs
            o_ref[:, :, :, o * D:(o + 1) * D] = acc.astype(o_ref.dtype)

    return kernel


def _neighborhood_attention(q_vol, k_vol, v_vol, k_bos, v_bos, th_w, *,
                            heads, dim_head, fc, fmap, kernel_size, dilation,
                            pad_front, max_frames):
    """q_vol: (B, NFp, fmap, fmap, H*D); k_vol/v_vol: (B, F_ext, Hp, Wp, H*D)."""
    B, NFp = q_vol.shape[0], q_vol.shape[1]
    inner = heads * dim_head
    kf, kh, kw = kernel_size
    df = dilation[0]
    NC = NFp // fc
    F_ext, Hp, Wp = k_vol.shape[1], k_vol.shape[2], k_vol.shape[3]
    Fh = fc + df * (kf - 1)
    J1 = kf * kh * kw + 1

    # lane-dense 4-D layouts (row-major reshapes, no HBM transposes)
    q4 = q_vol.reshape(B * NFp, fmap, fmap, inner)
    k4 = k_vol.reshape(B * F_ext, Hp, Wp, inner)
    v4 = v_vol.reshape(B * F_ext, Hp, Wp, inner)

    kern = _make_attn_kernel(H=heads, D=dim_head, fc=fc, fmap=fmap,
                             kernel_size=kernel_size, dilation=dilation,
                             pad_front=pad_front, max_frames=max_frames,
                             F_ext=F_ext)

    qo_spec = pl.BlockSpec((fc, fmap, fmap, inner),
                           lambda bi, ci: (bi * NC + ci, 0, 0, 0))
    bos_spec = pl.BlockSpec((1, 1, inner), lambda bi, ci: (bi, 0, 0))

    out = pl.pallas_call(
        kern,
        out_shape=jax.ShapeDtypeStruct((B * NFp, fmap, fmap, inner), q_vol.dtype),
        grid_spec=pltpu.PrefetchScalarGridSpec(
            num_scalar_prefetch=0,
            grid=(B, NC),
            in_specs=[
                qo_spec,
                pl.BlockSpec(memory_space=pl.ANY),     # compact K volume stays in HBM
                pl.BlockSpec(memory_space=pl.ANY),     # compact V volume stays in HBM
                bos_spec,
                bos_spec,
                pl.BlockSpec(memory_space=pltpu.MemorySpace.SMEM),  # talking-heads weights
            ],
            out_specs=qo_spec,
            scratch_shapes=[
                pltpu.VMEM((Fh, Hp, Wp, inner), q_vol.dtype),          # K halo
                pltpu.VMEM((Fh, Hp, Wp, inner), q_vol.dtype),          # V halo
                pltpu.VMEM((heads, J1, fc, fmap, fmap), jnp.float32),  # staged attention
                pltpu.VMEM((J1, fc, fmap, fmap), jnp.float32),         # mask bias
                pltpu.SemaphoreType.DMA((2,)),
            ]),
        compiler_params=pltpu.CompilerParams(
            dimension_semantics=("parallel", "parallel"),
            vmem_limit_bytes=40 * 1024 * 1024,   # fits v7x (64 MiB/TC) with headroom
        ),
    )(q4, k4, v4, k_bos, v_bos, th_w.astype(jnp.float32))
    return out.reshape(B, NFp, fmap, fmap, inner)


# ---------------------------------------------------------------------------
# full forward (wrapper = layout plumbing; heavy math in the Pallas kernels)
# ---------------------------------------------------------------------------

def sparse3dna_forward(x, params, *, video_shape, kernel_size=3, dilation=1,
                       heads=8, dim_head=64, causal=False, query_frames_chunk=None):
    """Forward of Sparse3DNA in eval mode (dropout off, rel_pos_bias=None).

    x:      (b, n, dim) with token 0 = BOS.
    params: w_q (dim, h*d), w_kv (dim, 2*h*d), w_th (h, h), w_out (h*d, dim), b_out (dim,)
    """
    kernel_size = cast_tuple(kernel_size, 3)
    dilation = cast_tuple(dilation, 3)
    assert all(k % 2 == 1 for k in kernel_size), "kernel size must be odd"

    b, n, dim = x.shape
    h, d = heads, dim_head
    inner = h * d
    max_frames, fmap, _ = video_shape
    tpf = fmap * fmap
    scale = d ** -0.5
    kf = kernel_size[0]
    df = dilation[0]

    pf = calc_same_padding(kernel_size[0], dilation[0])
    ph = calc_same_padding(kernel_size[1], dilation[1])
    pw = calc_same_padding(kernel_size[2], dilation[2])
    vid_pad = ((2 * pf, 0), (2 * ph, 0), (2 * pw, 0)) if causal else ((pf, pf), (ph, ph), (pw, pw))
    pad_front = (vid_pad[0][0], vid_pad[1][0], vid_pad[2][0])

    pad_tokens = padding_to_multiple_of(n - 1, tpf)
    num_frames = (n + pad_tokens) // tpf
    padded_x = jnp.pad(x, ((0, 0), (0, pad_tokens), (0, 0))) if pad_tokens else x
    npad = n + pad_tokens

    # projections (tiled Pallas matmuls); to_q/to_kv have no bias, to_out has bias
    q = pallas_linear(x.reshape(b * n, dim), params["w_q"]).reshape(b, n, inner)
    kv = pallas_linear(padded_x.reshape(b * npad, dim), params["w_kv"]).reshape(b, npad, 2 * inner)
    k, v = kv[..., :inner], kv[..., inner:]

    if n == 1:  # bos_only path
        v1 = v.reshape(b * npad, inner)
        return pallas_linear(v1, params["w_out"], params["b_out"]).reshape(b, npad, dim)

    q = q * jnp.asarray(scale, q.dtype)
    nq = n - 1

    q_tok = q[:, 1:]                               # BOS token does not query
    k_bos, v_bos = k[:, :1], v[:, :1]              # (b, 1, inner)
    bos_value = v_bos                              # BOS output is its own value
    k_tok, v_tok = k[:, 1:], v[:, 1:]              # (b, num_frames*tpf, inner)

    # frames-per-chunk (query tile = fc * fmap^2 tokens)
    if query_frames_chunk is None:
        query_frames_chunk = max(1, 256 // tpf)
    fc = max(1, min(int(query_frames_chunk), num_frames))
    NFp = _round_up(num_frames, fc)
    extra_f = NFp - num_frames

    # compact zero-padded K/V volumes (the only copies of K/V the kernel reads)
    pad5 = ((0, 0),
            (vid_pad[0][0], vid_pad[0][1] + extra_f),
            vid_pad[1], vid_pad[2], (0, 0))
    k_vol = jnp.pad(k_tok.reshape(b, num_frames, fmap, fmap, inner), pad5)
    v_vol = jnp.pad(v_tok.reshape(b, num_frames, fmap, fmap, inner), pad5)

    # queries folded into the frame grid, padded to whole frame-chunks
    pad_q = NFp * tpf - nq
    q_vol = jnp.pad(q_tok, ((0, 0), (0, pad_q), (0, 0))) if pad_q else q_tok
    q_vol = q_vol.reshape(b, NFp, fmap, fmap, inner)

    out_vol = _neighborhood_attention(
        q_vol, k_vol, v_vol, k_bos, v_bos, params["w_th"],
        heads=h, dim_head=d, fc=fc, fmap=fmap, kernel_size=kernel_size,
        dilation=dilation, pad_front=pad_front, max_frames=max_frames)

    out_tok = out_vol.reshape(b, NFp * tpf, inner)[:, :nq]        # lane-dense (b, nq, h*d)
    out_full = jnp.concatenate([bos_value, out_tok], axis=1)      # (b, n, h*d)
    out = pallas_linear(out_full.reshape(b * n, inner), params["w_out"], params["b_out"])
    return out.reshape(b, n, dim)


# ---------------------------------------------------------------------------
# pure-JAX reference (literal translation of the torch forward, eval mode)
# ---------------------------------------------------------------------------

def _stable_softmax(t, axis=-1, alpha=32 ** 2):
    t = t / alpha
    t = t - jnp.max(t, axis=axis, keepdims=True)
    return jax.nn.softmax(t * alpha, axis=axis)


def sparse3dna_reference(x, params, *, video_shape, kernel_size=3, dilation=1,
                         heads=8, dim_head=64, causal=False):
    kernel_size = cast_tuple(kernel_size, 3)
    dilation = cast_tuple(dilation, 3)
    b, n, dim = x.shape
    h, d = heads, dim_head
    inner = h * d
    max_frames, fmap, _ = video_shape
    tpf = fmap * fmap
    scale = d ** -0.5
    pf = calc_same_padding(kernel_size[0], dilation[0])
    ph = calc_same_padding(kernel_size[1], dilation[1])
    pw = calc_same_padding(kernel_size[2], dilation[2])
    vid_pad = ((2 * pf, 0), (2 * ph, 0), (2 * pw, 0)) if causal else ((pf, pf), (ph, ph), (pw, pw))

    pad_tokens = padding_to_multiple_of(n - 1, tpf)
    num_frames = (n + pad_tokens) // tpf
    padded_x = jnp.pad(x, ((0, 0), (0, pad_tokens), (0, 0))) if pad_tokens else x

    q = x @ params["w_q"]
    kv = padded_x @ params["w_kv"]
    k, v = kv[..., :inner], kv[..., inner:]
    if n == 1:
        return v @ params["w_out"] + params["b_out"]

    def split(t):
        return t.reshape(t.shape[0], t.shape[1], h, d).transpose(0, 2, 1, 3)

    q, k, v = split(q) * scale, split(k), split(v)
    q = q[:, :, 1:]
    k_bos, v_bos = k[:, :, :1], v[:, :, :1]
    bos_value = v_bos
    k, v = k[:, :, 1:], v[:, :, 1:]
    k = k.reshape(b, h, num_frames, fmap, fmap, d)
    v = v.reshape(b, h, num_frames, fmap, fmap, d)
    pad6 = ((0, 0), (0, 0), vid_pad[0], vid_pad[1], vid_pad[2], (0, 0))
    k, v = jnp.pad(k, pad6), jnp.pad(v, pad6)

    nq = n - 1
    k_unf = _unfold3d(k, kernel_size, dilation)[:, :, :nq]
    v_unf = _unfold3d(v, kernel_size, dilation)[:, :, :nq]
    k_unf = jnp.concatenate(
        [jnp.broadcast_to(k_bos[:, :, :, None, :], (b, h, nq, 1, d)), k_unf], axis=3)
    v_unf = jnp.concatenate(
        [jnp.broadcast_to(v_bos[:, :, :, None, :], (b, h, nq, 1, d)), v_unf], axis=3)

    sim = jnp.einsum('bhid,bhijd->bhij', q, k_unf)
    mask = _build_neighborhood_mask(video_shape, kernel_size, dilation, vid_pad)[:nq]
    sim = jnp.where(mask[None, None], -jnp.finfo(sim.dtype).max, sim)
    attn = _stable_softmax(sim, axis=-1)
    attn = jnp.einsum('oh,bhij->boij', params["w_th"], attn)
    out = jnp.einsum('bhij,bhijd->bhid', attn, v_unf)
    out = jnp.concatenate([bos_value, out], axis=2)
    out = out.transpose(0, 2, 1, 3).reshape(b, n, inner)
    return out @ params["w_out"] + params["b_out"]


# ---------------------------------------------------------------------------
# demo / correctness check
# ---------------------------------------------------------------------------

if __name__ == "__main__":
    key = jax.random.PRNGKey(0)
    ks = jax.random.split(key, 6)

    # Small config: video of 4 frames of 4x4 tokens, dim=64, 2 heads of dim_head=64.
    video_shape = (4, 4, 4)
    dim = 64
    heads = 2
    dim_head = 64
    inner = heads * dim_head
    kernel_size = 3
    dilation = 1

    b = 2
    n = video_shape[0] * video_shape[1] * video_shape[2] + 1   # BOS + all video tokens = 65

    params = {
        "w_q":   jax.random.normal(ks[0], (dim, inner), jnp.float32) / jnp.sqrt(dim),
        "w_kv":  jax.random.normal(ks[1], (dim, 2 * inner), jnp.float32) / jnp.sqrt(dim),
        "w_th":  jax.random.normal(ks[2], (heads, heads), jnp.float32) / jnp.sqrt(heads),
        "w_out": jax.random.normal(ks[3], (inner, dim), jnp.float32) / jnp.sqrt(inner),
        "b_out": jax.random.normal(ks[4], (dim,), jnp.float32) * 0.01,
    }
    x = jax.random.normal(ks[5], (b, n, dim), jnp.float32)

    # query_frames_chunk=2 -> 2 frame-chunks per batch, exercising the dynamic halo DMA.
    out = sparse3dna_forward(x, params, video_shape=video_shape, kernel_size=kernel_size,
                             dilation=dilation, heads=heads, dim_head=dim_head,
                             causal=False, query_frames_chunk=2)
    out = jax.block_until_ready(out)

    ref = sparse3dna_reference(x, params, video_shape=video_shape, kernel_size=kernel_size,
                               dilation=dilation, heads=heads, dim_head=dim_head, causal=False)
    ref = jax.block_until_ready(ref)

    assert out.shape == (b, n, dim)
    max_err = float(jnp.max(jnp.abs(out - ref)))
    assert jnp.allclose(out, ref, atol=2e-2, rtol=2e-2), f"mismatch vs reference (max err {max_err})"
    print("KERNEL_OK")
</pallas_src>

<mosaic_0001>
module attributes {stable_mosaic.version = 11 : i64} {
  func.func @_linear_kernel(%arg0: i32, %arg1: memref<136x64xf32, #tpu.memory_space<vmem>>, %arg2: memref<64x128xf32, #tpu.memory_space<vmem>>, %arg3: memref<1x128xf32, #tpu.memory_space<vmem>>, %arg4: memref<136x128xf32, #tpu.memory_space<vmem>>) attributes {dimension_semantics = [#tpu.dimension_semantics<parallel>], iteration_bounds = array<i64: 1>, scalar_prefetch = 0 : i64, scratch_operands = 0 : i64, tpu.core_type = #tpu.core_type<tc>, window_params = [{transform_indices = @transform_0, window_bounds = array<i64: 136, 64>}, {pipeline_mode = #tpu.pipeline_mode<synchronous>, transform_indices = @transform_1, window_bounds = array<i64: 64, 128>}, {pipeline_mode = #tpu.pipeline_mode<synchronous>, transform_indices = @transform_2, window_bounds = array<i64: 1, 128>}, {transform_indices = @transform_3, window_bounds = array<i64: 136, 128>}]} {
    %c0 = arith.constant 0 : index
    %c0_0 = arith.constant 0 : index
    %0 = vector.load %arg1[%c0, %c0_0] : memref<136x64xf32, #tpu.memory_space<vmem>>, vector<136x64xf32>
    %c0_1 = arith.constant 0 : index
    %c0_2 = arith.constant 0 : index
    %1 = vector.load %arg2[%c0_1, %c0_2] : memref<64x128xf32, #tpu.memory_space<vmem>>, vector<64x128xf32>
    %cst = arith.constant dense<0.000000e+00> : vector<136x128xf32>
    %2 = tpu.matmul %0, %1, %cst {dimension_numbers = #tpu.dot_dimension_numbers<[1], [0], [0], [1], [0, 0, 1, 1], [], []>} : vector<136x64xf32>, vector<64x128xf32>, vector<136x128xf32> -> vector<136x128xf32>
    %c0_3 = arith.constant 0 : index
    %c0_4 = arith.constant 0 : index
    %3 = vector.load %arg3[%c0_3, %c0_4] : memref<1x128xf32, #tpu.memory_space<vmem>>, vector<1x128xf32>
    %4 = vector.broadcast %3 : vector<1x128xf32> to vector<136x128xf32>
    %5 = arith.addf %2, %4 : vector<136x128xf32>
    %c0_5 = arith.constant 0 : index
    %c0_6 = arith.constant 0 : index
    %6 = vector.load %arg4[%c0_5, %c0_6] : memref<136x128xf32, #tpu.memory_space<vmem>>, vector<136x128xf32>
    tpu.vector_store %arg4[%c0_5, %c0_6], %5 {strides = array<i32>} : memref<136x128xf32, #tpu.memory_space<vmem>>, vector<136x128xf32>,
    return
  }
  func.func @transform_0(%arg0: i32) -> (i32, i32) {
    %c0_i32 = arith.constant 0 : i32
    %c0_i32_0 = arith.constant 0 : i32
    return %arg0, %c0_i32 : i32, i32
  }
  func.func @transform_1(%arg0: i32) -> (i32, i32) {
    %c0_i32 = arith.constant 0 : i32
    %c0_i32_0 = arith.constant 0 : i32
    %c0_i32_1 = arith.constant 0 : i32
    return %c0_i32, %c0_i32_0 : i32, i32
  }
  func.func @transform_2(%arg0: i32) -> (i32, i32) {
    %c0_i32 = arith.constant 0 : i32
    %c0_i32_0 = arith.constant 0 : i32
    %c0_i32_1 = arith.constant 0 : i32
    return %c0_i32, %c0_i32_0 : i32, i32
  }
  func.func @transform_3(%arg0: i32) -> (i32, i32) {
    %c0_i32 = arith.constant 0 : i32
    %c0_i32_0 = arith.constant 0 : i32
    return %arg0, %c0_i32 : i32, i32
  }
}

</mosaic_0001>

<llo_original>
// kernel: tpu_custom_call.1
$region0: #{tpu_custom_call.1}
  #allocation0 [shape = 'u32[]', space=smem, size = 0x4, offset = 0x4, fixed_abs, tag = 'smem constant byte address 0x4 - core index']
  #allocation1 [shape = 'u32[144,128]{1,0:T(1,128)}', space=vmem, size = 0x12000, scoped, tag = 'internal scratch']
  %s0 = inlined_call_operand.vmem [shape: f32[136,64], index: 0, kind: input, shape index: {}]
  %s1 = inlined_call_operand.vmem [shape: f32[64,128], index: 1, kind: input, shape index: {}]
  %s2 = inlined_call_operand.vmem [shape: f32[1,128], index: 2, kind: input, shape index: {}]
  %s3 = inlined_call_operand.hbm [shape: f32[136,128], index: 3, kind: output, shape index: {}]
  %s4 = sld [smem:[#allocation0]]
  $region22: #{tpu_custom_call.1} parent=0
    _
  %s6 = ssub.s32 1, %s4
  %s7 = scalar_select 0, %s6, %s4
  $region1: #{tpu_custom_call.1} parent=0
    #allocation2 [shape = 'u8[69632]{0}', space=vmem, size = 0x11000, scoped, tag = 'output window, operand 0, single buffered']
    #allocation3 [shape = 's32[1]{0}', space=sflag, size = 0x4, scoped, tag = 'scoped memory for tpu_custom_call.1']
    %8 = vsyncpa [#allocation3], 0
    // Predicated region
    $region2: #{tpu_custom_call.1} parent=1 // pred_check
      _
    $region3: #{tpu_custom_call.1} parent=1 // pred_check_branch
      %10 = sbr.rel (0) target = $region5
    $region4: #{tpu_custom_call.1} parent=1 // pred_region
      _
    $region5: #{tpu_custom_call.1} parent=1 // pred_fallthru
      _
    // Predicated region
    $region6: #{tpu_custom_call.1} parent=1 // pred_check
      _
    $region7: #{tpu_custom_call.1} parent=1 // pred_check_branch
      %12 = sbr.rel (0) target = $region9
    $region8: #{tpu_custom_call.1} parent=1 // pred_region
      _
    $region9: #{tpu_custom_call.1} parent=1 // pred_fallthru
      _
    // Predicated region
    $region10: #{tpu_custom_call.1} parent=1 // pred_check
      _
    $region11: #{tpu_custom_call.1} parent=1 // pred_check_branch
      %14 = sbr.rel (0) target = $region13
    $region12: #{tpu_custom_call.1} parent=1 // pred_region
      _
    $region13: #{tpu_custom_call.1} parent=1 // pred_fallthru
      _
    %v15 = vld [vmem:[%s0] sm:$0xff]
    %v16 = vld [vmem:[%s0 + $0x8] sm:$0xff]
    %v17 = vld [vmem:[%s0 + $0x10] sm:$0xff]
    %v18 = vld [vmem:[%s0 + $0x18] sm:$0xff]
    %v19 = vld [vmem:[%s0 + $0x20] sm:$0xff]
    %v20 = vld [vmem:[%s0 + $0x28] sm:$0xff]
    %v21 = vld [vmem:[%s0 + $0x30] sm:$0xff]
    %v22 = vld [vmem:[%s0 + $0x38] sm:$0xff]
    %v23 = vld [vmem:[%s0 + $0x40] sm:$0xff]
    %v24 = vld [vmem:[%s0 + $0x48] sm:$0xff]
    %v25 = vld [vmem:[%s0 + $0x50] sm:$0xff]
    %v26 = vld [vmem:[%s0 + $0x58] sm:$0xff]
    %v27 = vld [vmem:[%s0 + $0x60] sm:$0xff]
    %v28 = vld [vmem:[%s0 + $0x68] sm:$0xff]
    %v29 = vld [vmem:[%s0 + $0x70] sm:$0xff]
    %v30 = vld [vmem:[%s0 + $0x78] sm:$0xff]
    %v31 = vld [vmem:[%s0 + $0x80] sm:$0xff]
    %v32 = vld [vmem:[%s1] sm:$0xff]
    %v33 = vld [vmem:[%s1 + $0x8] sm:$0xff]
    %v34 = vld [vmem:[%s1 + $0x10] sm:$0xff]
    %v35 = vld [vmem:[%s1 + $0x18] sm:$0xff]
    %v36 = vld [vmem:[%s1 + $0x20] sm:$0xff]
    %v37 = vld [vmem:[%s1 + $0x28] sm:$0xff]
    %v38 = vld [vmem:[%s1 + $0x30] sm:$0xff]
    %v39 = vld [vmem:[%s1 + $0x38] sm:$0xff]
    %v40 = vld [vmem:[%s2] sm:$0x1]
    %v42 = vlaneseq
    %v43 = vshrl.u32 %v42, 7
    %v44 = vsub.s32 0, %v43
    %v45 = vrot.slane %v40, %v44
    %vm47 = vcmask 523264
    %v49 = vsel %vm47, %v15, 0
    %v52 = vsel %vm47, %v16, 0
    %v55 = vsel %vm47, %v17, 0
    %v58 = vsel %vm47, %v18, 0
    %v61 = vsel %vm47, %v19, 0
    %v64 = vsel %vm47, %v20, 0
    %v67 = vsel %vm47, %v21, 0
    %v70 = vsel %vm47, %v22, 0
    %v73 = vsel %vm47, %v23, 0
    %v76 = vsel %vm47, %v24, 0
    %v79 = vsel %vm47, %v25, 0
    %v82 = vsel %vm47, %v26, 0
    %v85 = vsel %vm47, %v27, 0
    %v88 = vsel %vm47, %v28, 0
    %v91 = vsel %vm47, %v29, 0
    %v94 = vsel %vm47, %v30, 0
    %v97 = vsel %vm47, %v31, 0
    %99 = vmatprep.subr.mxu0 0.0
    %100 = vmatpush1.msra.mxu0 %v32
    %101 = vmatprep.subr.mxu0 0.0
    %102 = vmatpush1.msra.mxu0 %v33
    %103 = vmatprep.subr.mxu0 0.0
    %104 = vmatpush1.msra.mxu0 %v34
    %105 = vmatprep.subr.mxu0 0.0
    %106 = vmatpush1.msra.mxu0 %v35
    %107 = vmatprep.subr.mxu0 0.0
    %108 = vmatpush1.msra.mxu0 %v36
    %109 = vmatprep.subr.mxu0 0.0
    %110 = vmatpush1.msra.mxu0 %v37
    %111 = vmatprep.subr.mxu0 0.0
    %112 = vmatpush1.msra.mxu0 %v38
    %113 = vmatprep.subr.mxu0 0.0
    %114 = vmatpush1.msra.mxu0 %v39
    %115 = vmatprep.subr.mxu0 0.0
    %116 = vmatpush1.msra.mxu0 0.0
    %117 = vmatprep.subr.mxu0 0.0
    %118 = vmatpush1.msra.mxu0 0.0
    %119 = vmatprep.subr.mxu0 0.0
    %120 = vmatpush1.msra.mxu0 0.0
    %121 = vmatprep.subr.mxu0 0.0
    %122 = vmatpush1.msra.mxu0 0.0
    %123 = vmatprep.subr.mxu0 0.0
    %124 = vmatpush1.msra.mxu0 0.0
    %125 = vmatprep.subr.mxu0 0.0
    %126 = vmatpush1.msra.mxu0 0.0
    %127 = vmatprep.subr.mxu0 0.0
    %128 = vmatpush1.msra.mxu0 0.0
    %129 = vmatprep.subr.mxu0 0.0
    %130 = vmatpush1.msra.mxu0 0.0
    %131 = vmatprep.subr.mxu0 0.0
    %132 = vmatpush1.msra.mxu0 0.0
    %133 = vmatprep.subr.mxu0 0.0
    %134 = vmatpush1.msra.mxu0 0.0
    %135 = vmatprep.subr.mxu0 0.0
    %136 = vmatpush1.msra.mxu0 0.0
    %137 = vmatprep.subr.mxu0 0.0
    %138 = vmatpush1.msra.mxu0 0.0
    %139 = vmatprep.subr.mxu0 0.0
    %140 = vmatpush1.msra.mxu0 0.0
    %141 = vmatprep.subr.mxu0 0.0
    %142 = vmatpush1.msra.mxu0 0.0
    %143 = vmatprep.subr.mxu0 0.0
    %144 = vmatpush1.msra.mxu0 0.0
    %145 = vmatprep.subr.mxu0 0.0
    %146 = vmatpush1.msra.mxu0 0.0
    %147 = vmatprep.subr.mxu0 0.0
    %148 = vmatpush1.msra.mxu0 0.0
    %149 = vmatprep.subr.mxu0 0.0
    %150 = vmatpush1.msra.mxu0 0.0
    %151 = vmatprep.subr.mxu0 0.0
    %152 = vmatpush1.msra.mxu0 0.0
    %153 = vmatprep.subr.mxu0 0.0
    %154 = vmatpush1.msra.mxu0 0.0
    %155 = vmatprep.subr.mxu0 0.0
    %156 = vmatpush1.msra.mxu0 0.0
    %157 = vmatprep.subr.mxu0 0.0
    %158 = vmatpush1.msra.mxu0 0.0
    %159 = vmatprep.subr.mxu0 0.0
    %160 = vmatpush1.msra.mxu0 0.0
    %161 = vmatprep.subr.mxu0 0.0
    %162 = vmatpush1.msra.mxu0 0.0
    %163 = vmatprep.mubr.f32.mxu0 0.0
    %164 = vmatmul.mubr.f32.gmra.mrb[0].mxu0 %v49
    %v165 = vpop.f32.mrb[0].mxu0
    %v166 = vadd.f32 %v45, %v165
    %v167 = vpop.f32.mrb[0].mxu0
    %168 = vmatprep.mubr.f32.mxu0 0.0
    %169 = vmatmul.mubr.f32.gmra.mrb[0].mxu0 %v52
    %v170 = vpop.f32.mrb[0].mxu0
    %v171 = vadd.f32 %v45, %v170
    %v172 = vpop.f32.mrb[0].mxu0
    %173 = vmatprep.mubr.f32.mxu0 0.0
    %174 = vmatmul.mubr.f32.gmra.mrb[0].mxu0 %v55
    %v175 = vpop.f32.mrb[0].mxu0
    %v176 = vadd.f32 %v45, %v175
    %v177 = vpop.f32.mrb[0].mxu0
    %178 = vmatprep.mubr.f32.mxu0 0.0
    %179 = vmatmul.mubr.f32.gmra.mrb[0].mxu0 %v58
    %v180 = vpop.f32.mrb[0].mxu0
    %v181 = vadd.f32 %v45, %v180
    %v182 = vpop.f32.mrb[0].mxu0
    %183 = vmatprep.mubr.f32.mxu0 0.0
    %184 = vmatmul.mubr.f32.gmra.mrb[0].mxu0 %v61
    %v185 = vpop.f32.mrb[0].mxu0
    %v186 = vadd.f32 %v45, %v185
    %v187 = vpop.f32.mrb[0].mxu0
    %188 = vmatprep.mubr.f32.mxu0 0.0
    %189 = vmatmul.mubr.f32.gmra.mrb[0].mxu0 %v64
    %v190 = vpop.f32.mrb[0].mxu0
    %v191 = vadd.f32 %v45, %v190
    %v192 = vpop.f32.mrb[0].mxu0
    %193 = vmatprep.mubr.f32.mxu0 0.0
    %194 = vmatmul.mubr.f32.gmra.mrb[0].mxu0 %v67
    %v195 = vpop.f32.mrb[0].mxu0
    %v196 = vadd.f32 %v45, %v195
    %v197 = vpop.f32.mrb[0].mxu0
    %198 = vmatprep.mubr.f32.mxu0 0.0
    %199 = vmatmul.mubr.f32.gmra.mrb[0].mxu0 %v70
    %v200 = vpop.f32.mrb[0].mxu0
    %v201 = vadd.f32 %v45, %v200
    %v202 = vpop.f32.mrb[0].mxu0
    %203 = vmatprep.mubr.f32.mxu0 0.0
    %204 = vmatmul.mubr.f32.gmra.mrb[0].mxu0 %v73
    %v205 = vpop.f32.mrb[0].mxu0
    %v206 = vadd.f32 %v45, %v205
    %v207 = vpop.f32.mrb[0].mxu0
    %208 = vmatprep.mubr.f32.mxu0 0.0
    %209 = vmatmul.mubr.f32.gmra.mrb[0].mxu0 %v76
    %v210 = vpop.f32.mrb[0].mxu0
    %v211 = vadd.f32 %v45, %v210
    %v212 = vpop.f32.mrb[0].mxu0
    %213 = vmatprep.mubr.f32.mxu0 0.0
    %214 = vmatmul.mubr.f32.gmra.mrb[0].mxu0 %v79
    %v215 = vpop.f32.mrb[0].mxu0
    %v216 = vadd.f32 %v45, %v215
    %v217 = vpop.f32.mrb[0].mxu0
    %218 = vmatprep.mubr.f32.mxu0 0.0
    %219 = vmatmul.mubr.f32.gmra.mrb[0].mxu0 %v82
    %v220 = vpop.f32.mrb[0].mxu0
    %v221 = vadd.f32 %v45, %v220
    %v222 = vpop.f32.mrb[0].mxu0
    %223 = vmatprep.mubr.f32.mxu0 0.0
    %224 = vmatmul.mubr.f32.gmra.mrb[0].mxu0 %v85
    %v225 = vpop.f32.mrb[0].mxu0
    %v226 = vadd.f32 %v45, %v225
    %v227 = vpop.f32.mrb[0].mxu0
    %228 = vmatprep.mubr.f32.mxu0 0.0
    %229 = vmatmul.mubr.f32.gmra.mrb[0].mxu0 %v88
    %v230 = vpop.f32.mrb[0].mxu0
    %v231 = vadd.f32 %v45, %v230
    %v232 = vpop.f32.mrb[0].mxu0
    %233 = vmatprep.mubr.f32.mxu0 0.0
    %234 = vmatmul.mubr.f32.gmra.mrb[0].mxu0 %v91
    %v235 = vpop.f32.mrb[0].mxu0
    %v236 = vadd.f32 %v45, %v235
    %v237 = vpop.f32.mrb[0].mxu0
    %238 = vmatprep.mubr.f32.mxu0 0.0
    %239 = vmatmul.mubr.f32.gmra.mrb[0].mxu0 %v94
    %v240 = vpop.f32.mrb[0].mxu0
    %v241 = vadd.f32 %v45, %v240
    %v242 = vpop.f32.mrb[0].mxu0
    %243 = vmatprep.mubr.f32.mxu0 0.0
    %244 = vmatmul.mubr.f32.gmra.mrb[0].mxu0 %v97
    %v245 = vpop.f32.mrb[0].mxu0
    %v246 = vadd.f32 %v45, %v245
    %v247 = vpop.f32.mrb[0].mxu0
    %248 = vdwg.mxu0
    %249 = vst [vmem:[#allocation2] sm:$0xff] %v166
    %250 = vst [vmem:[#allocation2 + $0x8] sm:$0xff] %v171
    %251 = vst [vmem:[#allocation2 + $0x10] sm:$0xff] %v176
    %252 = vst [vmem:[#allocation2 + $0x18] sm:$0xff] %v181
    %253 = vst [vmem:[#allocation2 + $0x20] sm:$0xff] %v186
    %254 = vst [vmem:[#allocation2 + $0x28] sm:$0xff] %v191
    %255 = vst [vmem:[#allocation2 + $0x30] sm:$0xff] %v196
    %256 = vst [vmem:[#allocation2 + $0x38] sm:$0xff] %v201
    %257 = vst [vmem:[#allocation2 + $0x40] sm:$0xff] %v206
    %258 = vst [vmem:[#allocation2 + $0x48] sm:$0xff] %v211
    %259 = vst [vmem:[#allocation2 + $0x50] sm:$0xff] %v216
    %260 = vst [vmem:[#allocation2 + $0x58] sm:$0xff] %v221
    %261 = vst [vmem:[#allocation2 + $0x60] sm:$0xff] %v226
    %262 = vst [vmem:[#allocation2 + $0x68] sm:$0xff] %v231
    %263 = vst [vmem:[#allocation2 + $0x70] sm:$0xff] %v236
    %264 = vst [vmem:[#allocation2 + $0x78] sm:$0xff] %v241
    %265 = vst [vmem:[#allocation2 + $0x80] sm:$0xff] %v246
    // Predicated region
    $region14: #{tpu_custom_call.1} parent=1 // pred_check
      _
    $region15: #{tpu_custom_call.1} parent=1 // pred_check_branch
      %267 = sbr.rel (0) target = $region17
    $region16: #{tpu_custom_call.1} parent=1 // pred_region
      %s269 = ssub.s32 2176, 2176
      %270 = vsyncadd [#allocation3], %s269
      %s271 = sshll.u32 [#allocation2], 4
      %s272 = int_to_ptr.vmem [resolvable:$true] %s271
      %277 = dma.vmem_to_hbm [thread:$0]  %s272, 2176, %s3, [#allocation3], 128, 128, 8
    $region17: #{tpu_custom_call.1} parent=1 // pred_fallthru
      _
    // Predicated region
    $region18: #{tpu_custom_call.1} parent=1 // pred_check
      _
    $region19: #{tpu_custom_call.1} parent=1 // pred_check_branch
      %279 = sbr.rel (0) target = $region21
    $region20: #{tpu_custom_call.1} parent=1 // pred_region
      %280 = dma.done [#allocation3], 2176
    $region21: #{tpu_custom_call.1} parent=1 // pred_fallthru
      _
    %281 = vsyncpa [#allocation3], 1

</llo_original>
